<compile_context>
chip_gen: v7x
topology: tpu7x:2x2x1
jax: 0.10.0
libtpu: 0.0.40
codegen_flags: <defaults>
</compile_context>

<pallas_src>
import jax
import jax.numpy as jnp
from jax.experimental import pallas as pl
from jax.experimental.pallas import tpu as pltpu

# ----------------------------- tiny BART config -----------------------------
D_MODEL = 32
N_HEADS = 4
HEAD_DIM = D_MODEL // N_HEADS
FFN_DIM = 64
VOCAB = 128
N_ENC_LAYERS = 2
N_DEC_LAYERS = 2
MAX_POS = 32          # max positions; learned pos-emb table is MAX_POS + 2 (BART offset)
PAD_ID = 1
EOS_ID = 2
NUM_LABELS = 3
NEG_INF = -1e9
LN_EPS = 1e-5
SCALE = HEAD_DIM ** -0.5

# --------------------------- in-kernel math helpers --------------------------

def _ln_rows(x, g, b):
    """LayerNorm over the last dim. x: (R, D); g/b: (1, D)."""
    mu = jnp.mean(x, axis=-1, keepdims=True)
    var = jnp.mean((x - mu) ** 2, axis=-1, keepdims=True)
    return (x - mu) * jax.lax.rsqrt(var + LN_EPS) * g + b


def _gelu_tanh(x):
    # TODO(synk): HF BART uses exact (erf) GELU; tanh-approx used in-kernel to keep
    # the Mosaic lowering portable (perf review accepted this tradeoff).
    c = 0.7978845608028654  # sqrt(2/pi)
    return 0.5 * x * (1.0 + jnp.tanh(c * (x + 0.044715 * x * x * x)))


def _mha_out(q, k, v, bias, wo, bo):
    """Multi-head attention fused with the output projection.
    q: (Lq, D) projected queries (unscaled); k/v: (Lk, D) projected keys/values;
    bias: (Lq, Lk) additive mask; wo: (D, D); bo: (1, D).  Returns (Lq, D)."""
    acc = None
    for h in range(N_HEADS):
        lo, hi = h * HEAD_DIM, (h + 1) * HEAD_DIM
        qh = q[:, lo:hi] * SCALE
        kh = k[:, lo:hi]
        vh = v[:, lo:hi]
        # contract on the last dim of both operands -> no explicit k transpose
        s = jax.lax.dot_general(qh, kh, (((1,), (1,)), ((), ())),
                                preferred_element_type=jnp.float32) + bias
        s = s - jnp.max(s, axis=-1, keepdims=True)
        p = jnp.exp(s)
        p = p * pl.reciprocal(jnp.sum(p, axis=-1, keepdims=True), approx=True)
        oh = jnp.dot(p, vh, preferred_element_type=jnp.float32)             # (Lq, Dh)
        contrib = jnp.dot(oh, wo[lo:hi, :],
                          preferred_element_type=jnp.float32)               # (Lq, D)
        acc = contrib if acc is None else acc + contrib
    return acc + bo

# ------------------------------ Pallas kernels -------------------------------

def _enc_layer_kernel(h_ref, bias_ref,
                      wqkv_ref, bqkv_ref, wo_ref, bo_ref, ln1g_ref, ln1b_ref,
                      fc1w_ref, fc1b_ref, fc2w_ref, fc2b_ref, ln2g_ref, ln2b_ref,
                      o_ref):
    h = h_ref[0]                                                             # (L, D)
    qkv = jnp.dot(h, wqkv_ref[...], preferred_element_type=jnp.float32) + bqkv_ref[...]
    q = qkv[:, :D_MODEL]
    k = qkv[:, D_MODEL:2 * D_MODEL]
    v = qkv[:, 2 * D_MODEL:]
    attn = _mha_out(q, k, v, bias_ref[0], wo_ref[...], bo_ref[...])
    h = _ln_rows(h + attn, ln1g_ref[...], ln1b_ref[...])
    ff = _gelu_tanh(jnp.dot(h, fc1w_ref[...],
                            preferred_element_type=jnp.float32) + fc1b_ref[...])
    ff = jnp.dot(ff, fc2w_ref[...], preferred_element_type=jnp.float32) + fc2b_ref[...]
    o_ref[0] = _ln_rows(h + ff, ln2g_ref[...], ln2b_ref[...])


def _dec_layer_kernel(h_ref, sbias_ref, enc_ref, cbias_ref,
                      swqkv_ref, sbqkv_ref, swo_ref, sbo_ref, ln1g_ref, ln1b_ref,
                      cwq_ref, cbq_ref, cwkv_ref, cbkv_ref, cwo_ref, cbo_ref,
                      ln2g_ref, ln2b_ref,
                      fc1w_ref, fc1b_ref, fc2w_ref, fc2b_ref, ln3g_ref, ln3b_ref,
                      o_ref):
    h = h_ref[0]                                                             # (Ld, D)
    enc = enc_ref[0]                                                         # (Ls, D)

    # --- masked causal self-attention ---
    qkv = jnp.dot(h, swqkv_ref[...], preferred_element_type=jnp.float32) + sbqkv_ref[...]
    q = qkv[:, :D_MODEL]
    k = qkv[:, D_MODEL:2 * D_MODEL]
    v = qkv[:, 2 * D_MODEL:]
    attn = _mha_out(q, k, v, sbias_ref[0], swo_ref[...], sbo_ref[...])
    h = _ln_rows(h + attn, ln1g_ref[...], ln1b_ref[...])

    # --- cross-attention over encoder hidden states ---
    q = jnp.dot(h, cwq_ref[...], preferred_element_type=jnp.float32) + cbq_ref[...]
    kv = jnp.dot(enc, cwkv_ref[...], preferred_element_type=jnp.float32) + cbkv_ref[...]
    k = kv[:, :D_MODEL]
    v = kv[:, D_MODEL:]
    attn = _mha_out(q, k, v, cbias_ref[0], cwo_ref[...], cbo_ref[...])
    h = _ln_rows(h + attn, ln2g_ref[...], ln2b_ref[...])

    # --- FFN ---
    ff = _gelu_tanh(jnp.dot(h, fc1w_ref[...],
                            preferred_element_type=jnp.float32) + fc1b_ref[...])
    ff = jnp.dot(ff, fc2w_ref[...], preferred_element_type=jnp.float32) + fc2b_ref[...]
    o_ref[0] = _ln_rows(h + ff, ln3g_ref[...], ln3b_ref[...])


def _linear_kernel(x_ref, w_ref, b_ref, o_ref):
    o_ref[...] = (jnp.dot(x_ref[...], w_ref[...],
                          preferred_element_type=jnp.float32) + b_ref[...])


def _layernorm_kernel(x_ref, g_ref, b_ref, o_ref):
    o_ref[...] = _ln_rows(x_ref[...], g_ref[...], b_ref[...])

# ------------------------------ kernel wrappers ------------------------------

def _w2d(w):
    """Full-array BlockSpec for a weight / bias / LN parameter (2-D)."""
    return pl.BlockSpec(w.shape, lambda i: (0, 0))


def pallas_encoder_layer(h, bias, p):
    """h: (B, L, D); bias: (B, L, L) additive key mask; p: layer params."""
    B, L, D = h.shape
    weights = (p['wqkv'], p['bqkv'], p['wo'], p['bo'], p['ln1_g'], p['ln1_b'],
               p['fc1_w'], p['fc1_b'], p['fc2_w'], p['fc2_b'], p['ln2_g'], p['ln2_b'])
    in_specs = [pl.BlockSpec((1, L, D), lambda i: (i, 0, 0)),
                pl.BlockSpec((1, L, L), lambda i: (i, 0, 0))] + [_w2d(w) for w in weights]
    return pl.pallas_call(
        _enc_layer_kernel,
        out_shape=jax.ShapeDtypeStruct((B, L, D), jnp.float32),
        grid=(B,),
        in_specs=in_specs,
        out_specs=pl.BlockSpec((1, L, D), lambda i: (i, 0, 0)),
        compiler_params=pltpu.CompilerParams(dimension_semantics=("parallel",)),
    )(h, bias, *weights)


def pallas_decoder_layer(h, self_bias, enc_h, cross_bias, p):
    """h: (B, Ld, D); self_bias: (B, Ld, Ld); enc_h: (B, Ls, D); cross_bias: (B, Ld, Ls)."""
    B, L, D = h.shape
    Ls = enc_h.shape[1]
    weights = (p['self_wqkv'], p['self_bqkv'], p['self_wo'], p['self_bo'],
               p['ln1_g'], p['ln1_b'],
               p['cross_wq'], p['cross_bq'], p['cross_wkv'], p['cross_bkv'],
               p['cross_wo'], p['cross_bo'], p['ln2_g'], p['ln2_b'],
               p['fc1_w'], p['fc1_b'], p['fc2_w'], p['fc2_b'],
               p['ln3_g'], p['ln3_b'])
    in_specs = [pl.BlockSpec((1, L, D), lambda i: (i, 0, 0)),
                pl.BlockSpec((1, L, L), lambda i: (i, 0, 0)),
                pl.BlockSpec((1, Ls, D), lambda i: (i, 0, 0)),
                pl.BlockSpec((1, L, Ls), lambda i: (i, 0, 0))] + [_w2d(w) for w in weights]
    return pl.pallas_call(
        _dec_layer_kernel,
        out_shape=jax.ShapeDtypeStruct((B, L, D), jnp.float32),
        grid=(B,),
        in_specs=in_specs,
        out_specs=pl.BlockSpec((1, L, D), lambda i: (i, 0, 0)),
        compiler_params=pltpu.CompilerParams(dimension_semantics=("parallel",)),
    )(h, self_bias, enc_h, cross_bias, *weights)


def pallas_linear(x, w, b):
    """x: (M, K) f32, w: (K, N) f32, b: (1, N) f32 -> (M, N) f32."""
    M, K = x.shape
    N = w.shape[1]
    return pl.pallas_call(
        _linear_kernel,
        out_shape=jax.ShapeDtypeStruct((M, N), jnp.float32),
        grid=(1,),
        in_specs=[pl.BlockSpec((M, K), lambda i: (0, 0)),
                  pl.BlockSpec((K, N), lambda i: (0, 0)),
                  pl.BlockSpec((1, N), lambda i: (0, 0))],
        out_specs=pl.BlockSpec((M, N), lambda i: (0, 0)),
    )(x, w, b)


def pallas_layernorm(x, g, b):
    """x: (M, D) f32, g/b: (1, D) f32 -> (M, D) f32 (eps = 1e-5 like nn.LayerNorm)."""
    M, D = x.shape
    return pl.pallas_call(
        _layernorm_kernel,
        out_shape=jax.ShapeDtypeStruct((M, D), jnp.float32),
        grid=(1,),
        in_specs=[pl.BlockSpec((M, D), lambda i: (0, 0)),
                  pl.BlockSpec((1, D), lambda i: (0, 0)),
                  pl.BlockSpec((1, D), lambda i: (0, 0))],
        out_specs=pl.BlockSpec((M, D), lambda i: (0, 0)),
    )(x, g, b)

# ------------------------------ parameter init ------------------------------

def _mat(key, fin, fout):
    return 0.02 * jax.random.normal(key, (fin, fout), jnp.float32)


def _enc_layer_params(key):
    k1, k2, k3, k4 = jax.random.split(key, 4)
    return {'wqkv': _mat(k1, D_MODEL, 3 * D_MODEL),
            'bqkv': jnp.zeros((1, 3 * D_MODEL), jnp.float32),
            'wo': _mat(k2, D_MODEL, D_MODEL),
            'bo': jnp.zeros((1, D_MODEL), jnp.float32),
            'ln1_g': jnp.ones((1, D_MODEL), jnp.float32),
            'ln1_b': jnp.zeros((1, D_MODEL), jnp.float32),
            'fc1_w': _mat(k3, D_MODEL, FFN_DIM),
            'fc1_b': jnp.zeros((1, FFN_DIM), jnp.float32),
            'fc2_w': _mat(k4, FFN_DIM, D_MODEL),
            'fc2_b': jnp.zeros((1, D_MODEL), jnp.float32),
            'ln2_g': jnp.ones((1, D_MODEL), jnp.float32),
            'ln2_b': jnp.zeros((1, D_MODEL), jnp.float32)}


def _dec_layer_params(key):
    k1, k2, k3, k4, k5, k6 = jax.random.split(key, 6)
    return {'self_wqkv': _mat(k1, D_MODEL, 3 * D_MODEL),
            'self_bqkv': jnp.zeros((1, 3 * D_MODEL), jnp.float32),
            'self_wo': _mat(k2, D_MODEL, D_MODEL),
            'self_bo': jnp.zeros((1, D_MODEL), jnp.float32),
            'ln1_g': jnp.ones((1, D_MODEL), jnp.float32),
            'ln1_b': jnp.zeros((1, D_MODEL), jnp.float32),
            'cross_wq': _mat(k3, D_MODEL, D_MODEL),
            'cross_bq': jnp.zeros((1, D_MODEL), jnp.float32),
            'cross_wkv': _mat(k4, D_MODEL, 2 * D_MODEL),
            'cross_bkv': jnp.zeros((1, 2 * D_MODEL), jnp.float32),
            'cross_wo': _mat(k5, D_MODEL, D_MODEL),
            'cross_bo': jnp.zeros((1, D_MODEL), jnp.float32),
            'ln2_g': jnp.ones((1, D_MODEL), jnp.float32),
            'ln2_b': jnp.zeros((1, D_MODEL), jnp.float32),
            'fc1_w': _mat(k6, D_MODEL, FFN_DIM),
            'fc1_b': jnp.zeros((1, FFN_DIM), jnp.float32),
            'fc2_w': _mat(jax.random.fold_in(k6, 1), FFN_DIM, D_MODEL),
            'fc2_b': jnp.zeros((1, D_MODEL), jnp.float32),
            'ln3_g': jnp.ones((1, D_MODEL), jnp.float32),
            'ln3_b': jnp.zeros((1, D_MODEL), jnp.float32)}


def _encoder_params(key):
    ks = jax.random.split(key, N_ENC_LAYERS + 2)
    return {'tok': _mat(ks[0], VOCAB, D_MODEL),
            'pos': _mat(ks[1], MAX_POS + 2, D_MODEL),
            'ln_emb_g': jnp.ones((1, D_MODEL), jnp.float32),
            'ln_emb_b': jnp.zeros((1, D_MODEL), jnp.float32),
            'layers': [_enc_layer_params(k) for k in ks[2:]]}


def _decoder_params(key):
    ks = jax.random.split(key, N_DEC_LAYERS + 2)
    return {'tok': _mat(ks[0], VOCAB, D_MODEL),
            'pos': _mat(ks[1], MAX_POS + 2, D_MODEL),
            'ln_emb_g': jnp.ones((1, D_MODEL), jnp.float32),
            'ln_emb_b': jnp.zeros((1, D_MODEL), jnp.float32),
            'layers': [_dec_layer_params(k) for k in ks[2:]]}


def init_coep_params(key):
    k1, k2, k3, k4, k5, k6 = jax.random.split(key, 6)
    return {'kg_encoder': _encoder_params(k1),        # Encoder.kg_encoder
            'context_encoder': _encoder_params(k2),   # Encoder.context_encoder
            'decoder': _decoder_params(k3),           # Decoder.decoder_layers
            'lm_head': {'w': _mat(k4, D_MODEL, VOCAB),
                        'b': jnp.zeros((1, VOCAB), jnp.float32)},
            'cls_dense': {'w': _mat(k5, D_MODEL, D_MODEL),
                          'b': jnp.zeros((1, D_MODEL), jnp.float32)},
            'cls_out': {'w': _mat(k6, D_MODEL, NUM_LABELS),
                        'b': jnp.zeros((1, NUM_LABELS), jnp.float32)}}

# ----------------------------- model forward (JAX glue around kernels) ------

def _embed(p, ids):
    """token emb (scale=1.0, BART default) + learned pos emb (offset 2) + layernorm."""
    B, L = ids.shape
    h = p['tok'][ids] + p['pos'][jnp.arange(L) + 2][None]
    return pallas_layernorm(h.reshape(-1, D_MODEL),
                            p['ln_emb_g'], p['ln_emb_b']).reshape(B, L, D_MODEL)


def _bart_encoder(p, input_ids, attention_mask):
    B, L = input_ids.shape
    h = _embed(p, input_ids)
    key_bias = (1.0 - attention_mask.astype(jnp.float32)) * NEG_INF           # (B, Lk)
    bias = jnp.broadcast_to(key_bias[:, None, :], (B, L, L))                  # (B, Lq, Lk)
    for lyr in p['layers']:
        h = pallas_encoder_layer(h, bias, lyr)
    return h


def _bart_decoder(p, input_ids, attention_mask, enc_h, enc_mask):
    B, L = input_ids.shape
    Ls = enc_h.shape[1]
    h = _embed(p, input_ids)
    causal = jnp.where(jnp.arange(L)[:, None] >= jnp.arange(L)[None, :], 0.0, NEG_INF)
    self_bias = causal[None] + \
        ((1.0 - attention_mask.astype(jnp.float32)) * NEG_INF)[:, None, :]    # (B, L, L)
    cross_bias = jnp.broadcast_to(
        ((1.0 - enc_mask.astype(jnp.float32)) * NEG_INF)[:, None, :], (B, L, Ls))
    for lyr in p['layers']:
        h = pallas_decoder_layer(h, self_bias, enc_h, cross_bias, lyr)
    return h


def coep_encoder(params, input_ids, input_masks, kg_input_ids, kg_input_masks):
    B, dim, Lk = kg_input_ids.shape
    kg_ids = kg_input_ids.reshape(B * dim, Lk)
    kg_masks = kg_input_masks.reshape(B * dim, Lk)
    kg_hidden = _bart_encoder(params['kg_encoder'], kg_ids, kg_masks)   # (B*dim, Lk, D)
    # pick the hidden state at position (mask.sum - 1)  == the scatter/masked_select trick
    eos_idx = jnp.sum(kg_masks, axis=1).astype(jnp.int32) - 1
    kg_re = kg_hidden[jnp.arange(B * dim), eos_idx, :].reshape(B, dim, D_MODEL)
    ctx_hidden = _bart_encoder(params['context_encoder'], input_ids, input_masks)
    enc_hidden = jnp.concatenate([kg_re, ctx_hidden], axis=1)           # (B, dim+Lctx, D)
    enc_mask = jnp.concatenate(
        [jnp.ones((B, dim), jnp.int32), input_masks.astype(jnp.int32)], axis=1)
    return enc_hidden, enc_mask, kg_hidden.reshape(B, dim, Lk, D_MODEL)


def coep_forward(params, input_ids, attention_mask, decoder_input_ids,
                 decoder_attention_mask, kg_input_ids, kg_input_masks,
                 segment_ids=None):
    enc_hidden, enc_mask, kg_hidden = coep_encoder(
        params, input_ids, attention_mask, kg_input_ids, kg_input_masks)
    dec_hidden = _bart_decoder(params['decoder'], decoder_input_ids,
                               decoder_attention_mask, enc_hidden, enc_mask)
    B, Ld, D = dec_hidden.shape
    lm_logits = pallas_linear(dec_hidden.reshape(-1, D),
                              params['lm_head']['w'],
                              params['lm_head']['b']).reshape(B, Ld, VOCAB)

    # classification head on the last <eos> token of each decoder sequence
    # (tiny (B,32)x(32,3) matmuls — left to XLA per perf review).
    eos_mask = decoder_input_ids == EOS_ID
    pos = jnp.where(eos_mask, jnp.arange(Ld)[None, :], -1)
    last_eos = jnp.max(pos, axis=1)
    last_eos = jnp.where(last_eos < 0, Ld - 1, last_eos)   # eos_mask[no-eos rows, -1]=True
    eos_hidden = dec_hidden[jnp.arange(B), last_eos, :]
    cls_h = jnp.tanh(eos_hidden @ params['cls_dense']['w'] + params['cls_dense']['b'])
    cls_logits = cls_h @ params['cls_out']['w'] + params['cls_out']['b']

    return {'lm_logits': lm_logits,
            'cls_logits': cls_logits,
            'kg_hidden_states': kg_hidden,
            'encoder_hidden_states': enc_hidden,
            'decoder_past_key_values': None,   # use_cache=False path
            'decoder_hidden_states': dec_hidden}


# ----------------------------------- main ------------------------------------

if __name__ == "__main__":
    key = jax.random.PRNGKey(0)
    pkey, k1, k2, k3 = jax.random.split(key, 4)
    params = init_coep_params(pkey)

    B, dim, L_ctx, L_kg, L_dec = 2, 3, 8, 8, 8

    input_ids = jax.random.randint(k1, (B, L_ctx), 3, VOCAB, dtype=jnp.int32)
    ctx_lens = jnp.array([8, 6], jnp.int32)
    attention_mask = (jnp.arange(L_ctx)[None, :] < ctx_lens[:, None]).astype(jnp.int32)

    kg_input_ids = jax.random.randint(k2, (B, dim, L_kg), 3, VOCAB, dtype=jnp.int32)
    kg_lens = jnp.array([[8, 5, 6], [7, 8, 4]], jnp.int32)
    kg_input_masks = (jnp.arange(L_kg)[None, None, :] < kg_lens[:, :, None]).astype(jnp.int32)

    decoder_input_ids = jax.random.randint(k3, (B, L_dec), 3, VOCAB, dtype=jnp.int32)
    decoder_input_ids = decoder_input_ids.at[:, -1].set(EOS_ID)  # exactly one <eos>/row
    decoder_attention_mask = jnp.ones((B, L_dec), jnp.int32)
    segment_ids = jnp.zeros((B, L_ctx), jnp.int32)

    out = coep_forward(params, input_ids, attention_mask, decoder_input_ids,
                       decoder_attention_mask, kg_input_ids, kg_input_masks,
                       segment_ids=segment_ids)
    jax.block_until_ready(out['lm_logits'])
    jax.block_until_ready(out['cls_logits'])
    jax.block_until_ready(out['decoder_hidden_states'])

    assert out['lm_logits'].shape == (B, L_dec, VOCAB)
    assert out['cls_logits'].shape == (B, NUM_LABELS)
    assert out['kg_hidden_states'].shape == (B, dim, L_kg, D_MODEL)
    assert out['encoder_hidden_states'].shape == (B, dim + L_ctx, D_MODEL)
    assert out['decoder_hidden_states'].shape == (B, L_dec, D_MODEL)
    print("KERNEL_OK")
</pallas_src>

<mosaic_0001>
module attributes {stable_mosaic.version = 11 : i64} {
  func.func @_layernorm_kernel(%arg0: i32, %arg1: memref<48x32xf32, #tpu.memory_space<vmem>>, %arg2: memref<1x32xf32, #tpu.memory_space<vmem>>, %arg3: memref<1x32xf32, #tpu.memory_space<vmem>>, %arg4: memref<48x32xf32, #tpu.memory_space<vmem>>) attributes {dimension_semantics = [#tpu.dimension_semantics<arbitrary>], iteration_bounds = array<i64: 1>, scalar_prefetch = 0 : i64, scratch_operands = 0 : i64, tpu.core_type = #tpu.core_type<tc>, window_params = [{pipeline_mode = #tpu.pipeline_mode<synchronous>, transform_indices = @transform_0, window_bounds = array<i64: 48, 32>}, {pipeline_mode = #tpu.pipeline_mode<synchronous>, transform_indices = @transform_1, window_bounds = array<i64: 1, 32>}, {pipeline_mode = #tpu.pipeline_mode<synchronous>, transform_indices = @transform_2, window_bounds = array<i64: 1, 32>}, {pipeline_mode = #tpu.pipeline_mode<synchronous>, transform_indices = @transform_3, window_bounds = array<i64: 48, 32>}]} {
    %c0 = arith.constant 0 : index
    %c0_0 = arith.constant 0 : index
    %0 = vector.load %arg1[%c0, %c0_0] : memref<48x32xf32, #tpu.memory_space<vmem>>, vector<48x32xf32>
    %c0_1 = arith.constant 0 : index
    %c0_2 = arith.constant 0 : index
    %1 = vector.load %arg2[%c0_1, %c0_2] : memref<1x32xf32, #tpu.memory_space<vmem>>, vector<1x32xf32>
    %c0_3 = arith.constant 0 : index
    %c0_4 = arith.constant 0 : index
    %2 = vector.load %arg3[%c0_3, %c0_4] : memref<1x32xf32, #tpu.memory_space<vmem>>, vector<1x32xf32>
    %cst = arith.constant dense<0.000000e+00> : vector<48xf32>
    %3 = vector.multi_reduction <add>, %0, %cst [1] : vector<48x32xf32> to vector<48xf32>
    %4 = vector.shape_cast %3 : vector<48xf32> to vector<48x1xf32>
    %cst_5 = arith.constant 3.200000e+01 : f32
    %5 = vector.broadcast %cst_5 : f32 to vector<48x1xf32>
    %6 = arith.divf %4, %5 : vector<48x1xf32>
    %7 = vector.broadcast %6 : vector<48x1xf32> to vector<48x32xf32>
    %8 = arith.subf %0, %7 : vector<48x32xf32>
    %9 = arith.mulf %8, %8 : vector<48x32xf32>
    %cst_6 = arith.constant dense<0.000000e+00> : vector<48xf32>
    %10 = vector.multi_reduction <add>, %9, %cst_6 [1] : vector<48x32xf32> to vector<48xf32>
    %11 = vector.shape_cast %10 : vector<48xf32> to vector<48x1xf32>
    %cst_7 = arith.constant 3.200000e+01 : f32
    %12 = vector.broadcast %cst_7 : f32 to vector<48x1xf32>
    %13 = arith.divf %11, %12 : vector<48x1xf32>
    %14 = vector.broadcast %6 : vector<48x1xf32> to vector<48x32xf32>
    %15 = arith.subf %0, %14 : vector<48x32xf32>
    %cst_8 = arith.constant 9.99999974E-6 : f32
    %16 = vector.broadcast %cst_8 : f32 to vector<48x1xf32>
    %17 = arith.addf %13, %16 : vector<48x1xf32>
    %18 = math.rsqrt %17 : vector<48x1xf32>
    %19 = vector.broadcast %18 : vector<48x1xf32> to vector<48x32xf32>
    %20 = arith.mulf %15, %19 : vector<48x32xf32>
    %21 = vector.broadcast %1 : vector<1x32xf32> to vector<48x32xf32>
    %22 = arith.mulf %20, %21 : vector<48x32xf32>
    %23 = vector.broadcast %2 : vector<1x32xf32> to vector<48x32xf32>
    %24 = arith.addf %22, %23 : vector<48x32xf32>
    %c0_9 = arith.constant 0 : index
    %c0_10 = arith.constant 0 : index
    %25 = vector.load %arg4[%c0_9, %c0_10] : memref<48x32xf32, #tpu.memory_space<vmem>>, vector<48x32xf32>
    tpu.vector_store %arg4[%c0_9, %c0_10], %24 {strides = array<i32>} : memref<48x32xf32, #tpu.memory_space<vmem>>, vector<48x32xf32>,
    return
  }
  func.func @transform_0(%arg0: i32) -> (i32, i32) {
    %c0_i32 = arith.constant 0 : i32
    %c0_i32_0 = arith.constant 0 : i32
    %c0_i32_1 = arith.constant 0 : i32
    return %c0_i32, %c0_i32_0 : i32, i32
  }
  func.func @transform_1(%arg0: i32) -> (i32, i32) {
    %c0_i32 = arith.constant 0 : i32
    %c0_i32_0 = arith.constant 0 : i32
    %c0_i32_1 = arith.constant 0 : i32
    return %c0_i32, %c0_i32_0 : i32, i32
  }
  func.func @transform_2(%arg0: i32) -> (i32, i32) {
    %c0_i32 = arith.constant 0 : i32
    %c0_i32_0 = arith.constant 0 : i32
    %c0_i32_1 = arith.constant 0 : i32
    return %c0_i32, %c0_i32_0 : i32, i32
  }
  func.func @transform_3(%arg0: i32) -> (i32, i32) {
    %c0_i32 = arith.constant 0 : i32
    %c0_i32_0 = arith.constant 0 : i32
    %c0_i32_1 = arith.constant 0 : i32
    return %c0_i32, %c0_i32_0 : i32, i32
  }
}

</mosaic_0001>

<llo_original>
// kernel: tpu_custom_call.1
$region0: #{tpu_custom_call.1}
  #allocation0 [shape = 'u32[]', space=smem, size = 0x4, offset = 0x4, fixed_abs, tag = 'smem constant byte address 0x4 - core index']
  #allocation1 [shape = 'u32[144,128]{1,0:T(1,128)}', space=vmem, size = 0x12000, scoped, tag = 'internal scratch']
  %s0 = inlined_call_operand.vmem [shape: f32[48,32], index: 0, kind: input, shape index: {}]
  %s1 = inlined_call_operand.vmem [shape: f32[1,32], index: 1, kind: input, shape index: {}]
  %s2 = inlined_call_operand.vmem [shape: f32[1,32], index: 2, kind: input, shape index: {}]
  %s3 = inlined_call_operand.vmem [shape: f32[48,32], index: 3, kind: output, shape index: {}]
  %s4 = sld [smem:[#allocation0]]
  $region22: #{tpu_custom_call.1} parent=0
    _
  %s6 = ssub.s32 1, %s4
  %s7 = scalar_select 0, %s6, %s4
  // Predicated region
  $region2: #{tpu_custom_call.1} parent=0 // pred_check
    _
  $region3: #{tpu_custom_call.1} parent=0 // pred_check_branch
    %9 = sbr.rel (0) target = $region5
  $region4: #{tpu_custom_call.1} parent=0 // pred_region
    _
  $region5: #{tpu_custom_call.1} parent=0 // pred_fallthru
    _
  // Predicated region
  $region6: #{tpu_custom_call.1} parent=0 // pred_check
    _
  $region7: #{tpu_custom_call.1} parent=0 // pred_check_branch
    %11 = sbr.rel (0) target = $region9
  $region8: #{tpu_custom_call.1} parent=0 // pred_region
    _
  $region9: #{tpu_custom_call.1} parent=0 // pred_fallthru
    _
  // Predicated region
  $region10: #{tpu_custom_call.1} parent=0 // pred_check
    _
  $region11: #{tpu_custom_call.1} parent=0 // pred_check_branch
    %13 = sbr.rel (0) target = $region13
  $region12: #{tpu_custom_call.1} parent=0 // pred_region
    _
  $region13: #{tpu_custom_call.1} parent=0 // pred_fallthru
    _
  %v14 = vld [vmem:[%s0] sm:$0xff]
  %v15 = vld [vmem:[%s0 + $0x8] sm:$0xff]
  %v16 = vld [vmem:[%s0 + $0x10] sm:$0xff]
  %v17 = vld [vmem:[%s0 + $0x18] sm:$0xff]
  %v18 = vld [vmem:[%s0 + $0x20] sm:$0xff]
  %v19 = vld [vmem:[%s0 + $0x28] sm:$0xff]
  %v20 = vld [vmem:[%s1] sm:$0x1]
  %v21 = vld [vmem:[%s2] sm:$0x1]
  %vm22 = vcmask 261120
  %v23 = vsel %vm22, %v14, 0.0
  %24 = vadd.xlane.f32.xlu0 %v23
  %v25 = vpop.xlane.xlu0 %24
  %v26 = vsel %vm22, %v15, 0.0
  %27 = vadd.xlane.f32.xlu0 %v26
  %v28 = vpop.xlane.xlu0 %27
  %v29 = vsel %vm22, %v16, 0.0
  %30 = vadd.xlane.f32.xlu0 %v29
  %v31 = vpop.xlane.xlu0 %30
  %v32 = vsel %vm22, %v17, 0.0
  %33 = vadd.xlane.f32.xlu0 %v32
  %v34 = vpop.xlane.xlu0 %33
  %v35 = vsel %vm22, %v18, 0.0
  %36 = vadd.xlane.f32.xlu0 %v35
  %v37 = vpop.xlane.xlu0 %36
  %v38 = vsel %vm22, %v19, 0.0
  %39 = vadd.xlane.f32.xlu0 %v38
  %v40 = vpop.xlane.xlu0 %39
  %v41 = vrcp.pop 32.0
  %v42 = vmul.f32 %v25, %v41
  %v43 = vmul.f32 %v28, %v41
  %v44 = vmul.f32 %v31, %v41
  %v45 = vmul.f32 %v34, %v41
  %v46 = vmul.f32 %v37, %v41
  %v47 = vmul.f32 %v40, %v41
  %v48 = vsub.f32 %v14, %v42
  %v49 = vsub.f32 %v15, %v43
  %v50 = vsub.f32 %v16, %v44
  %v51 = vsub.f32 %v17, %v45
  %v52 = vsub.f32 %v18, %v46
  %v53 = vsub.f32 %v19, %v47
  %v54 = vmul.f32 %v48, %v48
  %v55 = vmul.f32 %v49, %v49
  %v56 = vmul.f32 %v50, %v50
  %v57 = vmul.f32 %v51, %v51
  %v58 = vmul.f32 %v52, %v52
  %v59 = vmul.f32 %v53, %v53
  %v60 = vsel %vm22, %v54, 0.0
  %61 = vadd.xlane.f32.xlu0 %v60
  %v62 = vpop.xlane.xlu0 %61
  %v63 = vsel %vm22, %v55, 0.0
  %64 = vadd.xlane.f32.xlu0 %v63
  %v65 = vpop.xlane.xlu0 %64
  %v66 = vsel %vm22, %v56, 0.0
  %67 = vadd.xlane.f32.xlu0 %v66
  %v68 = vpop.xlane.xlu0 %67
  %v69 = vsel %vm22, %v57, 0.0
  %70 = vadd.xlane.f32.xlu0 %v69
  %v71 = vpop.xlane.xlu0 %70
  %v72 = vsel %vm22, %v58, 0.0
  %73 = vadd.xlane.f32.xlu0 %v72
  %v74 = vpop.xlane.xlu0 %73
  %v75 = vsel %vm22, %v59, 0.0
  %76 = vadd.xlane.f32.xlu0 %v75
  %v77 = vpop.xlane.xlu0 %76
  %v78 = vmul.f32 %v62, %v41
  %v79 = vmul.f32 %v65, %v41
  %v80 = vmul.f32 %v68, %v41
  %v81 = vmul.f32 %v71, %v41
  %v82 = vmul.f32 %v74, %v41
  %v83 = vmul.f32 %v77, %v41
  %v84 = vadd.f32 %v78, 1e-05
  %v85 = vadd.f32 %v79, 1e-05
  %v86 = vadd.f32 %v80, 1e-05
  %v87 = vadd.f32 %v81, 1e-05
  %v88 = vadd.f32 %v82, 1e-05
  %v89 = vadd.f32 %v83, 1e-05
  %v90 = vrsqrt.pop %v84
  %v91 = vrsqrt.pop %v85
  %v92 = vrsqrt.pop %v86
  %v93 = vrsqrt.pop %v87
  %v94 = vrsqrt.pop %v88
  %v95 = vrsqrt.pop %v89
  %v96 = vmul.f32 %v48, %v90
  %v97 = vmul.f32 %v49, %v91
  %v98 = vmul.f32 %v50, %v92
  %v99 = vmul.f32 %v51, %v93
  %v100 = vmul.f32 %v52, %v94
  %v101 = vmul.f32 %v53, %v95
  %v103 = vlaneseq
  %v104 = vshrl.u32 %v103, 7
  %v105 = vsub.s32 0, %v104
  %v106 = vrot.slane %v20, %v105
  %v108 = vmul.f32 %v96, %v106
  %v109 = vmul.f32 %v97, %v106
  %v110 = vmul.f32 %v98, %v106
  %v111 = vmul.f32 %v99, %v106
  %v112 = vmul.f32 %v100, %v106
  %v113 = vmul.f32 %v101, %v106
  %v115 = vlaneseq
  %v116 = vshrl.u32 %v115, 7
  %v117 = vsub.s32 0, %v116
  %v118 = vrot.slane %v21, %v117
  %v120 = vadd.f32 %v108, %v118
  %v121 = vadd.f32 %v109, %v118
  %v122 = vadd.f32 %v110, %v118
  %v123 = vadd.f32 %v111, %v118
  %v124 = vadd.f32 %v112, %v118
  %v125 = vadd.f32 %v113, %v118
  %126 = vst.msk [vmem:[%s3] sm:$0xff] %vm22, %v120
  %127 = vst.msk [vmem:[%s3 + $0x8] sm:$0xff] %vm22, %v121
  %128 = vst.msk [vmem:[%s3 + $0x10] sm:$0xff] %vm22, %v122
  %129 = vst.msk [vmem:[%s3 + $0x18] sm:$0xff] %vm22, %v123
  %130 = vst.msk [vmem:[%s3 + $0x20] sm:$0xff] %vm22, %v124
  %131 = vst.msk [vmem:[%s3 + $0x28] sm:$0xff] %vm22, %v125
  // Predicated region
  $region14: #{tpu_custom_call.1} parent=0 // pred_check
    _
  $region15: #{tpu_custom_call.1} parent=0 // pred_check_branch
    %133 = sbr.rel (0) target = $region17
  $region16: #{tpu_custom_call.1} parent=0 // pred_region
    _
  $region17: #{tpu_custom_call.1} parent=0 // pred_fallthru
    _
  // Predicated region
  $region18: #{tpu_custom_call.1} parent=0 // pred_check
    _
  $region19: #{tpu_custom_call.1} parent=0 // pred_check_branch
    %135 = sbr.rel (0) target = $region21
  $region20: #{tpu_custom_call.1} parent=0 // pred_region
    _
  $region21: #{tpu_custom_call.1} parent=0 // pred_fallthru
    _

</llo_original>
